<compile_context>
chip_gen: v7x
topology: tpu7x:2x2x1
jax: 0.10.0
libtpu: 0.0.40
codegen_flags: <defaults>
</compile_context>

<pallas_src>
import math

import jax
import jax.numpy as jnp
from jax import lax
from jax.experimental import pallas as pl
from jax.experimental.pallas import tpu as pltpu


def _attn_kernel(x_ref, w_ref, b_ref, o_ref):
    # x_ref: (Nb, S, E)   w_ref: (E, 2D + Dpad)   b_ref: (1, 2D + Dpad)   o_ref: (Nb, S, Dpad)
    d_pad = o_ref.shape[-1]
    d = (w_ref.shape[-1] - d_pad) // 2          # true qkv_dim
    nb = x_ref.shape[0]

    w = w_ref[...]                              # load fused weights / bias once per grid step
    b = b_ref[...]

    for bi in range(nb):                        # static unroll; nb is small (<= batch)
        x = x_ref[bi]                                                        # (S, E)

        # One fused projection for (pre-scaled) Q, K and zero-padded V.
        qkv = jnp.dot(x, w, preferred_element_type=jnp.float32) + b          # (S, 2D + Dpad)
        q = qkv[:, :d]                                                       # (S, D) already * 1/sqrt(D)
        k = qkv[:, d:2 * d]                                                  # (S, D)
        v = qkv[:, 2 * d:]                                                   # (S, Dpad)

        # scores: contract the last dim of q with the last dim of k (== q @ k.T, no transpose)
        s = lax.dot_general(q, k, (((1,), (1,)), ((), ())),
                            preferred_element_type=jnp.float32)              # (S, S)

        # numerically stable softmax along the last axis
        m = jnp.max(s, axis=-1, keepdims=True)
        e = jnp.exp(s - m)
        p = e * pl.reciprocal(jnp.sum(e, axis=-1, keepdims=True), approx=True)

        # TODO(synk): dropout on attention weights is identity in eval mode; a training-mode
        # version would mask `p` using pltpu.prng_seed + pltpu.prng_random_bits.

        o_ref[bi] = jnp.dot(p, v, preferred_element_type=jnp.float32).astype(o_ref.dtype)


def scaled_dot_product_attention(x, wq, wk, wv, bq, bk, bv, qkv_dim):
    """x: (N, S, E) float32; w*: (E, D) (stored transposed); b*: (D,). Returns (N, S, D)."""
    N, S, E = x.shape
    D = qkv_dim
    scale = 1.0 / math.sqrt(D)

    # Lane-dense output: pad the V projection (and thus the output) to a multiple of 128 lanes.
    D_pad = ((D + 127) // 128) * 128
    wv_p = jnp.zeros((E, D_pad), wv.dtype).at[:, :D].set(wv)
    bv_p = jnp.zeros((D_pad,), bv.dtype).at[:D].set(bv)

    # Fuse Q/K/V projections; fold the softmax scale into the Q weights & bias.
    w_qkv = jnp.concatenate([wq * scale, wk, wv_p], axis=1)                  # (E, 2D + Dpad)
    b_qkv = jnp.concatenate([bq * scale, bk, bv_p]).reshape(1, -1)           # (1, 2D + Dpad)
    F = 2 * D + D_pad

    # At most 2 fat grid steps (one per v7x TensorCore); single step for odd / unit batches.
    num_steps = 2 if (N >= 2 and N % 2 == 0) else 1
    nb = N // num_steps

    out = pl.pallas_call(
        _attn_kernel,
        out_shape=jax.ShapeDtypeStruct((N, S, D_pad), x.dtype),
        grid_spec=pltpu.PrefetchScalarGridSpec(
            num_scalar_prefetch=0,
            grid=(num_steps,),
            in_specs=[
                pl.BlockSpec((nb, S, E), lambda i: (i, 0, 0)),   # batch chunk of x
                pl.BlockSpec((E, F), lambda i: (0, 0)),          # fused QKV weights
                pl.BlockSpec((1, F), lambda i: (0, 0)),          # fused QKV bias
            ],
            out_specs=pl.BlockSpec((nb, S, D_pad), lambda i: (i, 0, 0)),
        ),
        compiler_params=pltpu.CompilerParams(
            dimension_semantics=("parallel",),
        ),
    )(x, w_qkv, b_qkv)

    return out[:, :, :D]


def _reference(x, wq, wk, wv, bq, bk, bv, qkv_dim):
    q = x @ wq + bq
    k = x @ wk + bk
    v = x @ wv + bv
    s = jnp.einsum("nsd,ntd->nst", q, k) / math.sqrt(qkv_dim)
    p = jax.nn.softmax(s, axis=-1)
    return jnp.einsum("nst,ntd->nsd", p, v)


if __name__ == "__main__":
    # Small shapes consistent with the ViT forward: (N, H*W + 1, embed_dim)
    N, H, W = 2, 4, 4
    S = H * W + 1          # 16 patches + cls token
    embed_dim = 32
    qkv_dim = 16

    key = jax.random.PRNGKey(0)
    kx, kq, kk, kv, kbq, kbk, kbv = jax.random.split(key, 7)

    x = jax.random.normal(kx, (N, S, embed_dim), dtype=jnp.float32)
    # nn.Linear(embed_dim, qkv_dim) weights, stored transposed as (E, D)
    lim = 1.0 / math.sqrt(embed_dim)
    wq = jax.random.uniform(kq, (embed_dim, qkv_dim), minval=-lim, maxval=lim, dtype=jnp.float32)
    wk = jax.random.uniform(kk, (embed_dim, qkv_dim), minval=-lim, maxval=lim, dtype=jnp.float32)
    wv = jax.random.uniform(kv, (embed_dim, qkv_dim), minval=-lim, maxval=lim, dtype=jnp.float32)
    bq = jax.random.uniform(kbq, (qkv_dim,), minval=-lim, maxval=lim, dtype=jnp.float32)
    bk = jax.random.uniform(kbk, (qkv_dim,), minval=-lim, maxval=lim, dtype=jnp.float32)
    bv = jax.random.uniform(kbv, (qkv_dim,), minval=-lim, maxval=lim, dtype=jnp.float32)

    out = scaled_dot_product_attention(x, wq, wk, wv, bq, bk, bv, qkv_dim)
    out = jax.block_until_ready(out)

    ref = _reference(x, wq, wk, wv, bq, bk, bv, qkv_dim)
    assert out.shape == (N, S, qkv_dim)
    # Tolerance accounts for the approximate (EUP) reciprocal in the softmax denominator.
    assert jnp.allclose(out, ref, atol=5e-3, rtol=5e-3), "mismatch vs reference"

    print("KERNEL_OK")
</pallas_src>

<mosaic_0001>
module attributes {stable_mosaic.version = 11 : i64} {
  func.func @_attn_kernel(%arg0: i32, %arg1: memref<1x17x32xf32, #tpu.memory_space<vmem>>, %arg2: memref<32x160xf32, #tpu.memory_space<vmem>>, %arg3: memref<1x160xf32, #tpu.memory_space<vmem>>, %arg4: memref<1x17x128xf32, #tpu.memory_space<vmem>>) attributes {dimension_semantics = [#tpu.dimension_semantics<parallel>], iteration_bounds = array<i64: 2>, scalar_prefetch = 0 : i64, scratch_operands = 0 : i64, tpu.core_type = #tpu.core_type<tc>, window_params = [{transform_indices = @transform_0, window_bounds = array<i64: 1, 17, 32>}, {pipeline_mode = #tpu.pipeline_mode<synchronous>, transform_indices = @transform_1, window_bounds = array<i64: 32, 160>}, {pipeline_mode = #tpu.pipeline_mode<synchronous>, transform_indices = @transform_2, window_bounds = array<i64: 1, 160>}, {transform_indices = @transform_3, window_bounds = array<i64: 1, 17, 128>}]} {
    %c0 = arith.constant 0 : index
    %c0_0 = arith.constant 0 : index
    %0 = vector.load %arg2[%c0, %c0_0] : memref<32x160xf32, #tpu.memory_space<vmem>>, vector<32x160xf32>
    %c0_1 = arith.constant 0 : index
    %c0_2 = arith.constant 0 : index
    %1 = vector.load %arg3[%c0_1, %c0_2] : memref<1x160xf32, #tpu.memory_space<vmem>>, vector<1x160xf32>
    %c0_3 = arith.constant 0 : index
    %c0_4 = arith.constant 0 : index
    %c0_5 = arith.constant 0 : index
    %2 = vector.load %arg1[%c0_3, %c0_4, %c0_5] : memref<1x17x32xf32, #tpu.memory_space<vmem>>, vector<1x17x32xf32>
    %3 = vector.shape_cast %2 : vector<1x17x32xf32> to vector<17x32xf32>
    %cst = arith.constant dense<0.000000e+00> : vector<17x160xf32>
    %4 = tpu.matmul %3, %0, %cst {dimension_numbers = #tpu.dot_dimension_numbers<[1], [0], [0], [1], [0, 0, 1, 1], [], []>} : vector<17x32xf32>, vector<32x160xf32>, vector<17x160xf32> -> vector<17x160xf32>
    %5 = vector.broadcast %1 : vector<1x160xf32> to vector<17x160xf32>
    %6 = arith.addf %4, %5 : vector<17x160xf32>
    %7 = vector.extract_strided_slice %6 {offsets = [0, 0], sizes = [17, 16], strides = [1, 1]} : vector<17x160xf32> to vector<17x16xf32>
    %8 = vector.extract_strided_slice %6 {offsets = [0, 16], sizes = [17, 16], strides = [1, 1]} : vector<17x160xf32> to vector<17x16xf32>
    %9 = vector.extract_strided_slice %6 {offsets = [0, 32], sizes = [17, 128], strides = [1, 1]} : vector<17x160xf32> to vector<17x128xf32>
    %cst_6 = arith.constant dense<0.000000e+00> : vector<17x17xf32>
    %10 = tpu.matmul %7, %8, %cst_6 {dimension_numbers = #tpu.dot_dimension_numbers<[1], [1], [0], [0], [0, 0, 1, 0], [], []>} : vector<17x16xf32>, vector<17x16xf32>, vector<17x17xf32> -> vector<17x17xf32>
    %cst_7 = arith.constant dense<0xFF800000> : vector<17xf32>
    %11 = vector.multi_reduction <maximumf>, %10, %cst_7 [1] : vector<17x17xf32> to vector<17xf32>
    %12 = vector.shape_cast %11 : vector<17xf32> to vector<17x1xf32>
    %13 = vector.broadcast %12 : vector<17x1xf32> to vector<17x17xf32>
    %14 = arith.subf %10, %13 : vector<17x17xf32>
    %15 = math.exp %14 : vector<17x17xf32>
    %cst_8 = arith.constant dense<0.000000e+00> : vector<17xf32>
    %16 = vector.multi_reduction <add>, %15, %cst_8 [1] : vector<17x17xf32> to vector<17xf32>
    %17 = vector.shape_cast %16 : vector<17xf32> to vector<17x1xf32>
    %18 = tpu.reciprocal %17 {approx = true} : vector<17x1xf32> -> vector<17x1xf32>
    %19 = vector.broadcast %18 : vector<17x1xf32> to vector<17x17xf32>
    %20 = arith.mulf %15, %19 : vector<17x17xf32>
    %cst_9 = arith.constant dense<0.000000e+00> : vector<17x128xf32>
    %21 = tpu.matmul %20, %9, %cst_9 {dimension_numbers = #tpu.dot_dimension_numbers<[1], [0], [0], [1], [0, 0, 1, 1], [], []>} : vector<17x17xf32>, vector<17x128xf32>, vector<17x128xf32> -> vector<17x128xf32>
    %c0_10 = arith.constant 0 : index
    %c0_11 = arith.constant 0 : index
    %c0_12 = arith.constant 0 : index
    %22 = vector.load %arg4[%c0_10, %c0_11, %c0_12] : memref<1x17x128xf32, #tpu.memory_space<vmem>>, vector<1x17x128xf32>
    %23 = vector.shape_cast %22 : vector<1x17x128xf32> to vector<17x128xf32>
    %24 = vector.shape_cast %21 : vector<17x128xf32> to vector<1x17x128xf32>
    tpu.vector_store %arg4[%c0_10, %c0_11, %c0_12], %24 {strides = array<i32>} : memref<1x17x128xf32, #tpu.memory_space<vmem>>, vector<1x17x128xf32>,
    return
  }
  func.func @transform_0(%arg0: i32) -> (i32, i32, i32) {
    %c0_i32 = arith.constant 0 : i32
    %c0_i32_0 = arith.constant 0 : i32
    %c0_i32_1 = arith.constant 0 : i32
    return %arg0, %c0_i32, %c0_i32_0 : i32, i32, i32
  }
  func.func @transform_1(%arg0: i32) -> (i32, i32) {
    %c0_i32 = arith.constant 0 : i32
    %c0_i32_0 = arith.constant 0 : i32
    %c0_i32_1 = arith.constant 0 : i32
    return %c0_i32, %c0_i32_0 : i32, i32
  }
  func.func @transform_2(%arg0: i32) -> (i32, i32) {
    %c0_i32 = arith.constant 0 : i32
    %c0_i32_0 = arith.constant 0 : i32
    %c0_i32_1 = arith.constant 0 : i32
    return %c0_i32, %c0_i32_0 : i32, i32
  }
  func.func @transform_3(%arg0: i32) -> (i32, i32, i32) {
    %c0_i32 = arith.constant 0 : i32
    %c0_i32_0 = arith.constant 0 : i32
    %c0_i32_1 = arith.constant 0 : i32
    return %arg0, %c0_i32, %c0_i32_0 : i32, i32, i32
  }
}

</mosaic_0001>

<llo_original>
// kernel: tpu_custom_call.1
$region0: #{tpu_custom_call.1}
  #allocation0 [shape = 'u32[]', space=smem, size = 0x4, offset = 0x4, fixed_abs, tag = 'smem constant byte address 0x4 - core index']
  #allocation1 [shape = 'u32[144,128]{1,0:T(1,128)}', space=vmem, size = 0x12000, scoped, tag = 'internal scratch']
  %s0 = inlined_call_operand.vmem [shape: f32[2,17,32], index: 0, kind: input, shape index: {}]
  %s1 = inlined_call_operand.vmem [shape: f32[32,160], index: 1, kind: input, shape index: {}]
  %s2 = inlined_call_operand.vmem [shape: f32[1,160], index: 2, kind: input, shape index: {}]
  %s3 = inlined_call_operand.vmem [shape: f32[2,17,128], index: 3, kind: output, shape index: {}]
  %s4 = sld [smem:[#allocation0]]
  $region45: #{tpu_custom_call.1} parent=0
    _
  %s6 = ssub.s32 1, %s4
  %s7 = scalar_select 0, %s6, %s4
  loop: start=0, step=1, limit=4
  $region2: #{tpu_custom_call.1} parent=0 // loop_pre_header
    _
  $region3: #{tpu_custom_call.1} parent=0 // loop_header
    %s9 = sphi 0, %s13
    %p10 = scmp.ge.s32.totalorder %s9, 4
    %s19 = sphi 0, %s21
    %s22 = sphi 0, %s19
    %s23 = sphi 0, %s22
    %s39 = sphi 0, %s23
    %s43 = sphi 0, %s43
    %s45 = sphi 0, %s43
    %s46 = sphi 0, %s45
    %s60 = sphi 0, %s46
    %s64 = sphi 0, %s64
    %s66 = sphi 0, %s64
    %s67 = sphi 0, %s66
    %s81 = sphi 0, %s67
    %s87 = sphi 0, %s89
    %s90 = sphi 0, %s87
    %s91 = sphi 0, %s90
    %s107 = sphi 0, %s91
  $region4: #{tpu_custom_call.1} parent=0 // loop_header_branch
    %12 = sbr.rel (%p10) target = $region8
  $region5: #{tpu_custom_call.1} parent=0 // loop_body
    %s14 = ssub.s32 %s9, 1
    %s15 = ssub.s32 %s9, 2
    %s16 = sadd.s32 %s9, 1
    %s17 = ssub.s32 %s9, %s16
    %p18 = scmp.eq.s32.totalorder %s17, 0
    %s20 = sadd.s32 %s19, 1
    %s21 = scalar_select %p18, %s19, %s20
    %p24 = pneg %p18
    %p25 = scmp.eq.s32.totalorder %s9, 1
    %p26 = por %p24, %p25
    %p27 = scmp.ne.s32.totalorder %s19, %s22
    %p28 = scmp.eq.s32.totalorder %s9, 0
    %p29 = por %p27, %p28
    %p30 = scmp.ne.s32.totalorder %s19, %s22
    %p31 = scmp.eq.s32.totalorder %s14, 1
    %p32 = por %p30, %p31
    %p33 = scmp.ne.s32.totalorder %s22, %s23
    %p34 = scmp.eq.s32.totalorder %s14, 0
    %p35 = por %p33, %p34
    %p36 = scmp.ne.s32.totalorder %s22, %s23
    %p37 = scmp.eq.s32.totalorder %s15, 1
    %p38 = por %p36, %p37
    %p40 = scmp.ne.s32.totalorder %s23, %s39
    %p41 = scmp.eq.s32.totalorder %s15, 0
    %p42 = por %p40, %p41
    %s44 = sadd.s32 %s43, 1
    %p47 = scmp.eq.s32.totalorder %s9, 1
    %p48 = scmp.ne.s32.totalorder %s43, %s45
    %p49 = scmp.eq.s32.totalorder %s9, 0
    %p50 = por %p48, %p49
    %p51 = scmp.ne.s32.totalorder %s43, %s45
    %p52 = scmp.eq.s32.totalorder %s14, 1
    %p53 = por %p51, %p52
    %p54 = scmp.ne.s32.totalorder %s45, %s46
    %p55 = scmp.eq.s32.totalorder %s14, 0
    %p56 = por %p54, %p55
    %p57 = scmp.ne.s32.totalorder %s45, %s46
    %p58 = scmp.eq.s32.totalorder %s15, 1
    %p59 = por %p57, %p58
    %p61 = scmp.ne.s32.totalorder %s46, %s60
    %p62 = scmp.eq.s32.totalorder %s15, 0
    %p63 = por %p61, %p62
    %s65 = sadd.s32 %s64, 1
    %p68 = scmp.eq.s32.totalorder %s9, 1
    %p69 = scmp.ne.s32.totalorder %s64, %s66
    %p70 = scmp.eq.s32.totalorder %s9, 0
    %p71 = por %p69, %p70
    %p72 = scmp.ne.s32.totalorder %s64, %s66
    %p73 = scmp.eq.s32.totalorder %s14, 1
    %p74 = por %p72, %p73
    %p75 = scmp.ne.s32.totalorder %s66, %s67
    %p76 = scmp.eq.s32.totalorder %s14, 0
    %p77 = por %p75, %p76
    %p78 = scmp.ne.s32.totalorder %s66, %s67
    %p79 = scmp.eq.s32.totalorder %s15, 1
    %p80 = por %p78, %p79
    %p82 = scmp.ne.s32.totalorder %s67, %s81
    %p83 = scmp.eq.s32.totalorder %s15, 0
    %p84 = por %p82, %p83
    %s85 = ssub.s32 %s9, %s16
    %p86 = scmp.eq.s32.totalorder %s85, 0
    %s88 = sadd.s32 %s87, 1
    %s89 = scalar_select %p86, %s87, %s88
    %p92 = pneg %p86
    %p93 = scmp.eq.s32.totalorder %s9, 1
    %p94 = por %p92, %p93
    %p95 = scmp.ne.s32.totalorder %s87, %s90
    %p96 = scmp.eq.s32.totalorder %s9, 0
    %p97 = por %p95, %p96
    %p98 = scmp.ne.s32.totalorder %s87, %s90
    %p99 = scmp.eq.s32.totalorder %s14, 1
    %p100 = por %p98, %p99
    %p101 = scmp.ne.s32.totalorder %s90, %s91
    %p102 = scmp.eq.s32.totalorder %s14, 0
    %p103 = por %p101, %p102
    %p104 = scmp.ne.s32.totalorder %s90, %s91
    %p105 = scmp.eq.s32.totalorder %s15, 1
    %p106 = por %p104, %p105
    %p108 = scmp.ne.s32.totalorder %s91, %s107
    %p109 = scmp.eq.s32.totalorder %s15, 0
    %p110 = por %p108, %p109
    %p111 = scmp.le.s32.totalorder 1, %s9
    %p112 = scmp.lt.s32.totalorder %s9, 3
    %p113 = pnand %p111, %p112
    %p114 = pneg %p113
    // Predicated region
    $region9: #{tpu_custom_call.1} parent=5 // pred_check
      _
    $region10: #{tpu_custom_call.1} parent=5 // pred_check_branch
      %116 = sbr.rel (%p113) target = $region12
    $region11: #{tpu_custom_call.1} parent=5 // pred_region
      %s117 = ssub.s32 %s9, 1
      // Predicated region
      $region13: #{tpu_custom_call.1} parent=11 // pred_check
        %p118 = pneg %p56
      $region14: #{tpu_custom_call.1} parent=11 // pred_check_branch
        %120 = sbr.rel (%p118) target = $region16
      $region15: #{tpu_custom_call.1} parent=11 // pred_region
        _
      $region16: #{tpu_custom_call.1} parent=11 // pred_fallthru
        _
      // Predicated region
      $region17: #{tpu_custom_call.1} parent=11 // pred_check
        %p121 = pneg %p77
      $region18: #{tpu_custom_call.1} parent=11 // pred_check_branch
        %123 = sbr.rel (%p121) target = $region20
      $region19: #{tpu_custom_call.1} parent=11 // pred_region
        _
      $region20: #{tpu_custom_call.1} parent=11 // pred_fallthru
        _
    $region12: #{tpu_custom_call.1} parent=5 // pred_fallthru
      _
    %p124 = scmp.lt.s32.totalorder %s9, 2
    // Predicated region
    $region21: #{tpu_custom_call.1} parent=5 // pred_check
      %p125 = pneg %p124
    $region22: #{tpu_custom_call.1} parent=5 // pred_check_branch
      %127 = sbr.rel (%p125) target = $region24
    $region23: #{tpu_custom_call.1} parent=5 // pred_region
      // Predicated region
      $region25: #{tpu_custom_call.1} parent=23 // pred_check
        %p128 = pneg %p29
      $region26: #{tpu_custom_call.1} parent=23 // pred_check_branch
        %130 = sbr.rel (%p128) target = $region28
      $region27: #{tpu_custom_call.1} parent=23 // pred_region
        %p131 = scmp.lt.s32.totalorder %s9, 1
        %s132 = scalar_select %p131, %s9, 1
        %s133 = smul.addr %s132, 3
        %s134 = smul.addr %s133, 8
        %s135 = scalar_lea.vmem %s0, %s134
      $region28: #{tpu_custom_call.1} parent=23 // pred_fallthru
        _
    $region24: #{tpu_custom_call.1} parent=5 // pred_fallthru
      _
    %p136 = scmp.le.s32.totalorder 1, %s9
    %p137 = scmp.lt.s32.totalorder %s9, 3
    %p138 = pnand %p136, %p137
    %p139 = pneg %p138
    // Predicated region
    $region29: #{tpu_custom_call.1} parent=5 // pred_check
      _
    $region30: #{tpu_custom_call.1} parent=5 // pred_check_branch
      %141 = sbr.rel (%p138) target = $region32
    $region31: #{tpu_custom_call.1} parent=5 // pred_region
      %s142 = ssub.s32 %s9, 1
      %p143 = scmp.lt.s32.totalorder %s14, 1
      %s144 = scalar_select %p143, %s14, 1
      %s145 = smul.addr %s144, 3
      %s146 = smul.addr %s145, 8
      %s147 = scalar_lea.vmem %s0, %s146
      %p148 = pneg %p35
      %p149 = pneg %p32
      %p150 = pneg %p56
      %p151 = pneg %p53
      %p152 = pneg %p77
      %p153 = pneg %p74
      %p154 = pneg %p103
      %p155 = pneg %p100
      %p156 = scmp.lt.s32.totalorder %s14, 1
      %s157 = scalar_select %p156, %s14, 1
      %s158 = smul.addr %s157, 3
      %s159 = smul.addr %s158, 8
      %s160 = scalar_lea.vmem %s3, %s159
      %p161 = scmp.lt.s32.totalorder %s14, 1
      %s162 = scalar_select %p161, %s14, 1
      %s163 = smul.addr %s162, 3
      %s164 = smul.addr %s163, 8
      %s165 = scalar_lea.vmem %s0, %s164
      %p166 = scmp.lt.s32.totalorder %s14, 1
      %s167 = scalar_select %p166, %s14, 1
      %s168 = smul.addr %s167, 3
      %s169 = smul.addr %s168, 8
      %s170 = scalar_lea.vmem %s3, %s169
      %v171 = vld [vmem:[%s1] sm:$0xff]
      %v172 = vld [vmem:[%s1 + $0x8] sm:$0xff]
      %v173 = vld [vmem:[%s1 + $0x10] sm:$0xff]
      %v174 = vld [vmem:[%s1 + $0x18] sm:$0xff]
      %v175 = vld [vmem:[%s1 + $0x20] sm:$0xff]
      %v176 = vld [vmem:[%s1 + $0x28] sm:$0xff]
      %v177 = vld [vmem:[%s1 + $0x30] sm:$0xff]
      %v178 = vld [vmem:[%s1 + $0x38] sm:$0xff]
      %v179 = vld [vmem:[%s2] sm:$0x3]
      %v180 = vld [vmem:[%s165] sm:$0xff]
      %v181 = vld [vmem:[%s165 + $0x8] sm:$0xff]
      %v182 = vld [vmem:[%s165 + $0x10] sm:$0x1]
      %v184 = vlaneseq
      %v185 = vshrl.u32 %v184, 7
      %v186 = vsub.s32 0, %v185
      %v187 = vrot.slane %v179, %v186
      %v188 = vlaneseq
      %v189 = vshrl.u32 %v188, 7
      %v190 = vsub.s32 1, %v189
      %v191 = vrot.slane %v179, %v190
      %vm194 = vcmask 261120
      %v196 = vsel %vm194, %v180, 0
      %v199 = vsel %vm194, %v181, 0
      %v202 = vsel %vm194, %v182, 0
      %204 = vmatprep.subr.mxu0 %v172
      %205 = vmatpush1.msra.mxu0 %v171
      %206 = vmatprep.subr.mxu0 %v174
      %207 = vmatpush1.msra.mxu0 %v173
      %208 = vmatprep.subr.mxu0 %v176
      %209 = vmatpush1.msra.mxu0 %v175
      %210 = vmatprep.subr.mxu0 %v178
      %211 = vmatpush1.msra.mxu0 %v177
      %212 = vmatprep.subr.mxu0 0.0
      %213 = vmatpush1.msra.mxu0 0.0
      %214 = vmatprep.subr.mxu0 0.0
      %215 = vmatpush1.msra.mxu0 0.0
      %216 = vmatprep.subr.mxu0 0.0
      %217 = vmatpush1.msra.mxu0 0.0
      %218 = vmatprep.subr.mxu0 0.0
      %219 = vmatpush1.msra.mxu0 0.0
      %220 = vmatprep.subr.mxu0 0.0
      %221 = vmatpush1.msra.mxu0 0.0
      %222 = vmatprep.subr.mxu0 0.0
      %223 = vmatpush1.msra.mxu0 0.0
      %224 = vmatprep.subr.mxu0 0.0
      %225 = vmatpush1.msra.mxu0 0.0
      %226 = vmatprep.subr.mxu0 0.0
      %227 = vmatpush1.msra.mxu0 0.0
      %228 = vmatprep.subr.mxu0 0.0
      %229 = vmatpush1.msra.mxu0 0.0
      %230 = vmatprep.subr.mxu0 0.0
      %231 = vmatpush1.msra.mxu0 0.0
      %232 = vmatprep.subr.mxu0 0.0
      %233 = vmatpush1.msra.mxu0 0.0
      %234 = vmatprep.subr.mxu0 0.0
      %235 = vmatpush1.msra.mxu0 0.0
      %236 = vmatprep.subr.mxu0 0.0
      %237 = vmatpush1.msra.mxu0 0.0
      %238 = vmatprep.subr.mxu0 0.0
      %239 = vmatpush1.msra.mxu0 0.0
      %240 = vmatprep.subr.mxu0 0.0
      %241 = vmatpush1.msra.mxu0 0.0
      %242 = vmatprep.subr.mxu0 0.0
      %243 = vmatpush1.msra.mxu0 0.0
      %244 = vmatprep.subr.mxu0 0.0
      %245 = vmatpush1.msra.mxu0 0.0
      %246 = vmatprep.subr.mxu0 0.0
      %247 = vmatpush1.msra.mxu0 0.0
      %248 = vmatprep.subr.mxu0 0.0
      %249 = vmatpush1.msra.mxu0 0.0
      %250 = vmatprep.subr.mxu0 0.0
      %251 = vmatpush1.msra.mxu0 0.0
      %252 = vmatprep.subr.mxu0 0.0
      %253 = vmatpush1.msra.mxu0 0.0
      %254 = vmatprep.subr.mxu0 0.0
      %255 = vmatpush1.msra.mxu0 0.0
      %256 = vmatprep.subr.mxu0 0.0
      %257 = vmatpush1.msra.mxu0 0.0
      %258 = vmatprep.subr.mxu0 0.0
      %259 = vmatpush1.msra.mxu0 0.0
      %260 = vmatprep.subr.mxu0 0.0
      %261 = vmatpush1.msra.mxu0 0.0
      %262 = vmatprep.subr.mxu0 0.0
      %263 = vmatpush1.msra.mxu0 0.0
      %264 = vmatprep.subr.mxu0 0.0
      %265 = vmatpush1.msra.mxu0 0.0
      %266 = vmatprep.subr.mxu0 0.0
      %267 = vmatpush1.msra.mxu0 0.0
      %268 = vmatprep.mubr.f32.mxu0 0.0
      %269 = vmatmul.mubr.f32.gmra.mrb[0].mxu0 %v196
      %v270 = vpop.f32.mrb[0].mxu0
      %v271 = vadd.f32 %v187, %v270
      %v272 = vpop.f32.mrb[0].mxu0
      %v273 = vadd.f32 %v191, %v272
      %274 = vmatprep.mubr.f32.mxu0 0.0
      %275 = vmatmul.mubr.f32.gmra.mrb[0].mxu0 %v199
      %v276 = vpop.f32.mrb[0].mxu0
      %v277 = vadd.f32 %v187, %v276
      %v278 = vpop.f32.mrb[0].mxu0
      %v279 = vadd.f32 %v191, %v278
      %280 = vmatprep.mubr.f32.mxu0 0.0
      %281 = vmatmul.mubr.f32.gmra.mrb[0].mxu0 %v202
      %v282 = vpop.f32.mrb[0].mxu0
      %v283 = vadd.f32 %v187, %v282
      %v284 = vpop.f32.mrb[0].mxu0
      %v285 = vadd.f32 %v191, %v284
      %286 = vdwg.mxu0
      %290 = vrot.lane.b32.xlu0 %v271, 112
      %v291 = vpop.permute.xlu0 %290
      %292 = vrot.lane.b32.xlu0 %v277, 112
      %v293 = vpop.permute.xlu0 %292
      %294 = vrot.lane.b32.xlu0 %v283, 112
      %v295 = vpop.permute.xlu0 %294
      %vm296 = vcmask 130048
      %v297 = vsel %vm296, %v271, 0
      %v299 = vsel %vm296, %v277, 0
      %v301 = vsel %vm296, %v283, 0
      %v303 = vsel %vm296, %v291, 0
      %v305 = vsel %vm296, %v293, 0
      %v307 = vsel %vm296, %v295, 0
      %309 = vmatprep.subr.mxu0 0.0
      %310 = vmatpush1.xpose.msra.mxu0 %v303
      %311 = vmatprep.subr.mxu0 0.0
      %312 = vmatpush1.xpose.msra.mxu0 %v305
      %313 = vmatprep.subr.mxu0 0.0
      %314 = vmatpush1.xpose.msra.mxu0 %v307
      %315 = vmatprep.subr.mxu0 0.0
      %316 = vmatpush1.xpose.msra.mxu0 0.0
      %317 = vmatprep.subr.mxu0 0.0
      %318 = vmatpush1.xpose.msra.mxu0 0.0
      %319 = vmatprep.subr.mxu0 0.0
      %320 = vmatpush1.xpose.msra.mxu0 0.0
      %321 = vmatprep.subr.mxu0 0.0
      %322 = vmatpush1.xpose.msra.mxu0 0.0
      %323 = vmatprep.subr.mxu0 0.0
      %324 = vmatpush1.xpose.msra.mxu0 0.0
      %325 = vmatprep.subr.mxu0 0.0
      %326 = vmatpush1.xpose.msra.mxu0 0.0
      %327 = vmatprep.subr.mxu0 0.0
      %328 = vmatpush1.xpose.msra.mxu0 0.0
      %329 = vmatprep.subr.mxu0 0.0
      %330 = vmatpush1.xpose.msra.mxu0 0.0
      %331 = vmatprep.subr.mxu0 0.0
      %332 = vmatpush1.xpose.msra.mxu0 0.0
      %333 = vmatprep.subr.mxu0 0.0
      %334 = vmatpush1.xpose.msra.mxu0 0.0
      %335 = vmatprep.subr.mxu0 0.0
      %336 = vmatpush1.xpose.msra.mxu0 0.0
      %337 = vmatprep.subr.mxu0 0.0
      %338 = vmatpush1.xpose.msra.mxu0 0.0
      %339 = vmatprep.subr.mxu0 0.0
      %340 = vmatpush1.xpose.msra.mxu0 0.0
      %341 = vmatprep.subr.mxu0 0.0
      %342 = vmatpush1.xpose.msra.mxu0 0.0
      %343 = vmatprep.subr.mxu0 0.0
      %344 = vmatpush1.xpose.msra.mxu0 0.0
      %345 = vmatprep.subr.mxu0 0.0
      %346 = vmatpush1.xpose.msra.mxu0 0.0
      %347 = vmatprep.subr.mxu0 0.0
      %348 = vmatpush1.xpose.msra.mxu0 0.0
      %349 = vmatprep.subr.mxu0 0.0
      %350 = vmatpush1.xpose.msra.mxu0 0.0
      %351 = vmatprep.subr.mxu0 0.0
      %352 = vmatpush1.xpose.msra.mxu0 0.0
      %353 = vmatprep.subr.mxu0 0.0
      %354 = vmatpush1.xpose.msra.mxu0 0.0
      %355 = vmatprep.subr.mxu0 0.0
      %356 = vmatpush1.xpose.msra.mxu0 0.0
      %357 = vmatprep.subr.mxu0 0.0
      %358 = vmatpush1.xpose.msra.mxu0 0.0
      %359 = vmatprep.subr.mxu0 0.0
      %360 = vmatpush1.xpose.msra.mxu0 0.0
      %361 = vmatprep.subr.mxu0 0.0
      %362 = vmatpush1.xpose.msra.mxu0 0.0
      %363 = vmatprep.subr.mxu0 0.0
      %364 = vmatpush1.xpose.msra.mxu0 0.0
      %365 = vmatprep.subr.mxu0 0.0
      %366 = vmatpush1.xpose.msra.mxu0 0.0
      %367 = vmatprep.subr.mxu0 0.0
      %368 = vmatpush1.xpose.msra.mxu0 0.0
      %369 = vmatprep.subr.mxu0 0.0
      %370 = vmatpush1.xpose.msra.mxu0 0.0
      %371 = vmatprep.subr.mxu0 0.0
      %372 = vmatpush1.xpose.msra.mxu0 0.0
      %373 = vmatprep.mubr.f32.mxu0 0.0
      %374 = vmatmul.mubr.f32.gmra.mrb[0].mxu0 %v297
      %v375 = vpop.f32.mrb[0].mxu0
      %v376 = vadd.f32 0.0, %v375
      %v377 = vpop.f32.mrb[0].mxu0
      %378 = vmatprep.mubr.f32.mxu0 0.0
      %379 = vmatmul.mubr.f32.gmra.mrb[0].mxu0 %v299
      %v380 = vpop.f32.mrb[0].mxu0
      %v381 = vadd.f32 0.0, %v380
      %v382 = vpop.f32.mrb[0].mxu0
      %383 = vmatprep.mubr.f32.mxu0 0.0
      %384 = vmatmul.mubr.f32.gmra.mrb[0].mxu0 %v301
      %v385 = vpop.f32.mrb[0].mxu0
      %v386 = vadd.f32 0.0, %v385
      %v387 = vpop.f32.mrb[0].mxu0
      %388 = vdwg.mxu0
      %vm389 = vcmask 138240
      %v390 = vsel %vm389, %v376, -inf
      %391 = vmax.xlane.f32.xlu0 %v390
      %v392 = vpop.xlane.xlu0 %391
      %v393 = vsel %vm389, %v381, -inf
      %394 = vmax.xlane.f32.xlu0 %v393
      %v395 = vpop.xlane.xlu0 %394
      %vm396 = vcmask 131072
      %v397 = vsel %vm396, %v386, -inf
      %398 = vmax.xlane.f32.xlu0 %v397
      %v399 = vpop.xlane.xlu0 %398
      %v400 = vsub.f32 %v376, %v392
      %v401 = vsub.f32 %v381, %v395
      %v402 = vsub.f32 %v386, %v399
      %v403 = vmul.f32 %v400, 1.442695
      %v404 = vpow.pop %v403
      %v405 = vmul.f32 %v401, 1.442695
      %v406 = vpow.pop %v405
      %v407 = vmul.f32 %v402, 1.442695
      %v408 = vpow.pop %v407
      %v409 = vsel %vm389, %v404, 0.0
      %410 = vadd.xlane.f32.xlu0 %v409
      %v411 = vpop.xlane.xlu0 %410
      %v412 = vsel %vm389, %v406, 0.0
      %413 = vadd.xlane.f32.xlu0 %v412
      %v414 = vpop.xlane.xlu0 %413
      %v415 = vsel %vm396, %v408, 0.0
      %416 = vadd.xlane.f32.xlu0 %v415
      %v417 = vpop.xlane.xlu0 %416
      %v418 = vrcp.pop %v411
      %v419 = vrcp.pop %v414
      %v420 = vrcp.pop %v417
      %v421 = vmul.f32 %v404, %v418
      %v422 = vmul.f32 %v406, %v419
      %v423 = vmul.f32 %v408, %v420
      %427 = vrot.lane.b32.xlu0 %v271, 96
      %v428 = vpop.permute.xlu0 %427
      %429 = vrot.lane.b32.xlu0 %v273, 96
      %v430 = vpop.permute.xlu0 %429
      %431 = vrot.lane.b32.xlu0 %v277, 96
      %v432 = vpop.permute.xlu0 %431
      %433 = vrot.lane.b32.xlu0 %v279, 96
      %v434 = vpop.permute.xlu0 %433
      %435 = vrot.lane.b32.xlu0 %v283, 96
      %v436 = vpop.permute.xlu0 %435
      %437 = vrot.lane.b32.xlu0 %v285, 96
      %v438 = vpop.permute.xlu0 %437
      %vm439 = vcmask 785408
      %v440 = vsel %vm439, %v428, %v430
      %v441 = vsel %vm439, %v432, %v434
      %v442 = vsel %vm439, %v436, %v438
      %v446 = vsel %vm389, %v421, 0
      %v449 = vsel %vm389, %v422, 0
      %v452 = vsel %vm389, %v423, 0
      %vm454 = vcmask 1040384
      %v455 = vsel %vm454, %v442, 0
      %457 = vmatprep.subr.mxu0 0.0
      %458 = vmatpush1.msra.mxu0 %v440
      %459 = vmatprep.subr.mxu0 0.0
      %460 = vmatpush1.msra.mxu0 %v441
      %461 = vmatprep.subr.mxu0 0.0
      %462 = vmatpush1.msra.mxu0 %v455
      %463 = vmatprep.subr.mxu0 0.0
      %464 = vmatpush1.msra.mxu0 0.0
      %465 = vmatprep.subr.mxu0 0.0
      %466 = vmatpush1.msra.mxu0 0.0
      %467 = vmatprep.subr.mxu0 0.0
      %468 = vmatpush1.msra.mxu0 0.0
      %469 = vmatprep.subr.mxu0 0.0
      %470 = vmatpush1.msra.mxu0 0.0
      %471 = vmatprep.subr.mxu0 0.0
      %472 = vmatpush1.msra.mxu0 0.0
      %473 = vmatprep.subr.mxu0 0.0
      %474 = vmatpush1.msra.mxu0 0.0
      %475 = vmatprep.subr.mxu0 0.0
      %476 = vmatpush1.msra.mxu0 0.0
      %477 = vmatprep.subr.mxu0 0.0
      %478 = vmatpush1.msra.mxu0 0.0
      %479 = vmatprep.subr.mxu0 0.0
      %480 = vmatpush1.msra.mxu0 0.0
      %481 = vmatprep.subr.mxu0 0.0
      %482 = vmatpush1.msra.mxu0 0.0
      %483 = vmatprep.subr.mxu0 0.0
      %484 = vmatpush1.msra.mxu0 0.0
      %485 = vmatprep.subr.mxu0 0.0
      %486 = vmatpush1.msra.mxu0 0.0
      %487 = vmatprep.subr.mxu0 0.0
      %488 = vmatpush1.msra.mxu0 0.0
      %489 = vmatprep.subr.mxu0 0.0
      %490 = vmatpush1.msra.mxu0 0.0
      %491 = vmatprep.subr.mxu0 0.0
      %492 = vmatpush1.msra.mxu0 0.0
      %493 = vmatprep.subr.mxu0 0.0
      %494 = vmatpush1.msra.mxu0 0.0
      %495 = vmatprep.subr.mxu0 0.0
      %496 = vmatpush1.msra.mxu0 0.0
      %497 = vmatprep.subr.mxu0 0.0
      %498 = vmatpush1.msra.mxu0 0.0
      %499 = vmatprep.subr.mxu0 0.0
      %500 = vmatpush1.msra.mxu0 0.0
      %501 = vmatprep.subr.mxu0 0.0
      %502 = vmatpush1.msra.mxu0 0.0
      %503 = vmatprep.subr.mxu0 0.0
      %504 = vmatpush1.msra.mxu0 0.0
      %505 = vmatprep.subr.mxu0 0.0
      %506 = vmatpush1.msra.mxu0 0.0
      %507 = vmatprep.subr.mxu0 0.0
      %508 = vmatpush1.msra.mxu0 0.0
      %509 = vmatprep.subr.mxu0 0.0
      %510 = vmatpush1.msra.mxu0 0.0
      %511 = vmatprep.subr.mxu0 0.0
      %512 = vmatpush1.msra.mxu0 0.0
      %513 = vmatprep.subr.mxu0 0.0
      %514 = vmatpush1.msra.mxu0 0.0
      %515 = vmatprep.subr.mxu0 0.0
      %516 = vmatpush1.msra.mxu0 0.0
      %517 = vmatprep.subr.mxu0 0.0
      %518 = vmatpush1.msra.mxu0 0.0
      %519 = vmatprep.subr.mxu0 0.0
      %520 = vmatpush1.msra.mxu0 0.0
      %521 = vmatprep.mubr.f32.mxu0 0.0
      %522 = vmatmul.mubr.f32.gmra.mrb[0].mxu0 %v446
      %v523 = vpop.f32.mrb[0].mxu0
      %v524 = vadd.f32 0.0, %v523
      %v525 = vpop.f32.mrb[0].mxu0
      %526 = vmatprep.mubr.f32.mxu0 0.0
      %527 = vmatmul.mubr.f32.gmra.mrb[0].mxu0 %v449
      %v528 = vpop.f32.mrb[0].mxu0
      %v529 = vadd.f32 0.0, %v528
      %v530 = vpop.f32.mrb[0].mxu0
      %531 = vmatprep.mubr.f32.mxu0 0.0
      %532 = vmatmul.mubr.f32.gmra.mrb[0].mxu0 %v452
      %v533 = vpop.f32.mrb[0].mxu0
      %v534 = vadd.f32 0.0, %v533
      %v535 = vpop.f32.mrb[0].mxu0
      %536 = vdwg.mxu0
      %537 = vst [vmem:[%s170] sm:$0xff] %v524
      %538 = vst [vmem:[%s170 + $0x8] sm:$0xff] %v529
      %539 = vst [vmem:[%s170 + $0x10] sm:$0x1] %v534
      %p540 = scmp.lt.s32.totalorder %s14, 1
      %s541 = scalar_select %p540, %s14, 1
      %s542 = smul.addr %s541, 3
      %s543 = smul.addr %s542, 8
      %s544 = scalar_lea.vmem %s3, %s543
      // Predicated region
      $region33: #{tpu_custom_call.1} parent=31 // pred_check
        %p545 = pneg %p100
      $region34: #{tpu_custom_call.1} parent=31 // pred_check_branch
        %547 = sbr.rel (%p545) target = $region36
      $region35: #{tpu_custom_call.1} parent=31 // pred_region
        _
      $region36: #{tpu_custom_call.1} parent=31 // pred_fallthru
        _
    $region32: #{tpu_custom_call.1} parent=5 // pred_fallthru
      _
    %p548 = scmp.le.s32.totalorder 2, %s9
    // Predicated region
    $region37: #{tpu_custom_call.1} parent=5 // pred_check
      %p549 = pneg %p548
    $region38: #{tpu_custom_call.1} parent=5 // pred_check_branch
      %551 = sbr.rel (%p549) target = $region40
    $region39: #{tpu_custom_call.1} parent=5 // pred_region
      %s552 = ssub.s32 %s9, 2
      // Predicated region
      $region41: #{tpu_custom_call.1} parent=39 // pred_check
        %p553 = pneg %p106
      $region42: #{tpu_custom_call.1} parent=39 // pred_check_branch
        %555 = sbr.rel (%p553) target = $region44
      $region43: #{tpu_custom_call.1} parent=39 // pred_region
        %p556 = scmp.lt.s32.totalorder %s15, 1
        %s557 = scalar_select %p556, %s15, 1
        %s558 = smul.addr %s557, 3
        %s559 = smul.addr %s558, 8
        %s560 = scalar_lea.vmem %s3, %s559
      $region44: #{tpu_custom_call.1} parent=39 // pred_fallthru
        _
    $region40: #{tpu_custom_call.1} parent=5 // pred_fallthru
      _
  $region6: #{tpu_custom_call.1} parent=0 // loop_footer
    %s13 = sadd.s32 1, %s9
  $region7: #{tpu_custom_call.1} parent=0 // loop_footer_branch
    %8 = sbr.rel target = $region3
  $region8: #{tpu_custom_call.1} parent=0 // loop_exit
    _

</llo_original>
